<compile_context>
chip_gen: v6e
topology: v6e:2x2x1
jax: 0.10.0
libtpu: 0.0.40
codegen_flags: <defaults>
</compile_context>

<pallas_src>
import math
from functools import partial

import numpy as np
import jax
import jax.numpy as jnp
from jax.experimental import pallas as pl
from jax.experimental.pallas import tpu as pltpu

# ---------------------------------------------------------------------------
# Configuration consistent with the PyTorch module
# ---------------------------------------------------------------------------
SEQ_LEN = 16
LABEL_SIZE = 4
VOCAB_SIZE = 50
EMBEDDING_DIM = 32
CONV_KERNEL_SIZES = (3, 4)
OUT_CHANNELS = 8
MAXPOOL_KERNEL_SIZE = 2
LINEAR_DIMS = (32,)            # hidden dims; label_size appended like the module
BATCH = 2

CONV_STRIDE = 1
CONV_PADDING = 1


def _conv_out_size(seq_len, k, stride, padding):
    return int((seq_len - k + 2 * padding) / stride + 1)


def _maxpool_out_size(n, k, padding, stride, dilation):
    return int(math.floor((n + 2 * padding - dilation * (k - 1) - 1) / stride + 1))


# ---------------------------------------------------------------------------
# The single fused kernel
# ---------------------------------------------------------------------------
def _fused_kernel(*refs, B, L, E, V, kmax, pad, m, ROWS, POOL_ROWS, CM, num_linear):
    tok_ref, emb_ref, wm_ref, bm_ref = refs[:4]
    lin_refs = refs[4:4 + 2 * num_linear]
    n_in = 4 + 2 * num_linear
    o_ref = refs[n_in]
    col_ref = refs[n_in + 1]          # (B*ROWS, kmax*E) im2col scratch
    feat_ref = refs[n_in + 2]         # (B, POOL_ROWS*CM) flattened features

    # 1) Embedding lookup as a one-hot matmul (table is tiny, lives in VMEM),
    #    then ReLU (PyTorch applies conv to F.relu(embeddings)).
    tok = tok_ref[...]                                              # (B*L, 1) int32
    iota = jax.lax.broadcasted_iota(jnp.int32, (B * L, V), 1)
    onehot = jnp.where(iota == tok, 1.0, 0.0).astype(jnp.float32)   # (B*L, V)
    x = jnp.dot(onehot, emb_ref[...], preferred_element_type=jnp.float32)
    x = jnp.maximum(x, 0.0)                                         # (B*L, E)

    # 2) im2col: zero-fill the scratch (this provides the conv zero padding),
    #    then drop shifted row-slices of x into the per-tap lane blocks.
    col_ref[...] = jnp.zeros(col_ref.shape, col_ref.dtype)
    for b in range(B):
        for t in range(kmax):
            lo = max(0, pad - t)
            hi = min(ROWS, L + pad - t)
            if hi <= lo:
                continue
            col_ref[b * ROWS + lo: b * ROWS + hi, t * E:(t + 1) * E] = \
                x[b * L + lo + t - pad: b * L + hi + t - pad, :]

    # 3) One MXU matmul covers both conv branches and the whole batch, + bias.
    conv = jnp.dot(col_ref[...], wm_ref[...],
                   preferred_element_type=jnp.float32) + bm_ref[...]  # (B*ROWS, CM)

    # 4) MaxPool1d(kernel=stride=m, floor mode): max over adjacent row pairs.
    #    (Rows beyond each branch's valid conv length never reach a valid pool
    #    window; leftover entries are killed by zero rows in the permuted W1.)
    pooled = jnp.max(conv.reshape(B * POOL_ROWS, m, CM), axis=1)      # (B*POOL_ROWS, CM)

    # 5) Lane-dense flattened feature row per batch (position-major layout;
    #    the first Linear's rows were permuted host-side to match PyTorch's
    #    channel-major flatten).
    for b in range(B):
        for p in range(POOL_ROWS):
            feat_ref[b:b + 1, p * CM:(p + 1) * CM] = \
                pooled[b * POOL_ROWS + p: b * POOL_ROWS + p + 1, :]

    # 6) MLP (ReLU between linears) + log_softmax, all in-register.
    h = feat_ref[...]                                                 # (B, POOL_ROWS*CM)
    for i in range(num_linear):
        w = lin_refs[2 * i][...]
        bb = lin_refs[2 * i + 1][...]
        h = jnp.dot(h, w, preferred_element_type=jnp.float32) + bb
        if i < num_linear - 1:
            h = jnp.maximum(h, 0.0)
    mx = jnp.max(h, axis=1, keepdims=True)
    s = h - mx
    lse = jnp.log(jnp.sum(jnp.exp(s), axis=1, keepdims=True))
    o_ref[...] = (s - lse).astype(o_ref.dtype)                        # log_softmax(dim=1)


# ---------------------------------------------------------------------------
# Wrapper: merges branch weights, permutes the first Linear, one pallas_call
# ---------------------------------------------------------------------------
def cnn_classifier_forward(tokens, params):
    B, L = tokens.shape
    E, C, m = EMBEDDING_DIM, OUT_CHANNELS, MAXPOOL_KERNEL_SIZE
    pad = CONV_PADDING
    ks = CONV_KERNEL_SIZES
    kmax = max(ks)
    nbr = len(ks)
    CM = nbr * C
    ROWS = _conv_out_size(L, min(ks), CONV_STRIDE, pad)   # longest conv output
    assert ROWS % m == 0, "pooling pairs must not cross batch rows"
    POOL_ROWS = ROWS // m
    V = params["embedding"].shape[0]

    # Merged conv weight (kmax*E, CM): one lane-block of C channels per branch,
    # taps of shorter kernels zero-padded.  Merged bias (1, CM).
    wcols, bcols = [], []
    for k in ks:
        w = params[f"conv_{k}_w"].reshape(k * E, C)
        if k < kmax:
            w = jnp.concatenate([w, jnp.zeros(((kmax - k) * E, C), w.dtype)], axis=0)
        wcols.append(w)
        bcols.append(params[f"conv_{k}_b"])
    wm = jnp.concatenate(wcols, axis=1)                   # (kmax*E, CM)
    bm = jnp.concatenate(bcols, axis=1)                   # (1, CM)

    # Permute + zero-pad the first Linear's rows so that the kernel's
    # position-major feature layout reproduces PyTorch's channel-major flatten.
    W1 = params["lin_w"][0]
    F, H = W1.shape
    pools, offs, off = [], [], 0
    for k in ks:
        p = _maxpool_out_size(_conv_out_size(L, k, CONV_STRIDE, pad), m, 0, m, 1)
        pools.append(p)
        offs.append(off)
        off += p * C
    assert off == F
    perm = np.full(POOL_ROWS * CM, F, dtype=np.int32)     # F -> appended zero row
    for p in range(POOL_ROWS):
        for j in range(nbr):
            for c in range(C):
                if p < pools[j]:
                    perm[p * CM + j * C + c] = offs[j] + c * pools[j] + p
    w1eff = jnp.concatenate([W1, jnp.zeros((1, H), W1.dtype)], axis=0)[perm]

    lin_ws = [w1eff] + list(params["lin_w"][1:])
    lin_bs = list(params["lin_b"])
    label = lin_ws[-1].shape[1]

    tok_flat = tokens.reshape(B * L, 1).astype(jnp.int32)
    args = [tok_flat, params["embedding"], wm, bm]
    for w, b in zip(lin_ws, lin_bs):
        args += [w, b]

    kernel = partial(_fused_kernel, B=B, L=L, E=E, V=V, kmax=kmax, pad=pad, m=m,
                     ROWS=ROWS, POOL_ROWS=POOL_ROWS, CM=CM, num_linear=len(lin_ws))

    return pl.pallas_call(
        kernel,
        out_shape=jax.ShapeDtypeStruct((B, label), jnp.float32),
        grid=(1,),
        in_specs=[pl.BlockSpec(a.shape, lambda i: (0, 0)) for a in args],
        out_specs=pl.BlockSpec((B, label), lambda i: (0, 0)),
        scratch_shapes=[pltpu.VMEM((B * ROWS, kmax * E), jnp.float32),
                        pltpu.VMEM((B, POOL_ROWS * CM), jnp.float32)],
        compiler_params=pltpu.CompilerParams(dimension_semantics=("arbitrary",)),
    )(*args)


# ---------------------------------------------------------------------------
# Deterministic parameter init + pure-JAX reference (mirrors the PyTorch math)
# ---------------------------------------------------------------------------
def init_params(key):
    n_lin = len(LINEAR_DIMS) + 1
    keys = iter(jax.random.split(key, 1 + 2 * len(CONV_KERNEL_SIZES) + 2 * n_lin))
    params = {
        "embedding": jax.random.normal(next(keys), (VOCAB_SIZE, EMBEDDING_DIM),
                                       jnp.float32) * 0.1
    }
    flatten = 0
    for k in CONV_KERNEL_SIZES:
        params[f"conv_{k}_w"] = jax.random.normal(
            next(keys), (k, EMBEDDING_DIM, OUT_CHANNELS), jnp.float32) * 0.1
        params[f"conv_{k}_b"] = jax.random.normal(
            next(keys), (1, OUT_CHANNELS), jnp.float32) * 0.1
        co = _conv_out_size(SEQ_LEN, k, CONV_STRIDE, CONV_PADDING)
        flatten += _maxpool_out_size(co, MAXPOOL_KERNEL_SIZE, 0, MAXPOOL_KERNEL_SIZE, 1)
    flatten *= OUT_CHANNELS

    dims = [flatten] + list(LINEAR_DIMS) + [LABEL_SIZE]
    lin_w, lin_b = [], []
    for i in range(1, len(dims)):
        lin_w.append(jax.random.normal(next(keys), (dims[i - 1], dims[i]),
                                       jnp.float32) * 0.1)
        lin_b.append(jax.random.normal(next(keys), (1, dims[i]), jnp.float32) * 0.1)
    params["lin_w"] = lin_w
    params["lin_b"] = lin_b
    return params


def reference_forward(tokens, params):
    emb = params["embedding"][tokens]                             # (B, L, E)
    xr = jnp.maximum(emb, 0.0)
    outs = []
    for k in CONV_KERNEL_SIZES:
        w = params[f"conv_{k}_w"]                                 # (k, E, C)
        b = params[f"conv_{k}_b"][0]                              # (C,)
        xpad = jnp.pad(xr, ((0, 0), (1, 1), (0, 0)))
        l_out = _conv_out_size(SEQ_LEN, k, CONV_STRIDE, CONV_PADDING)
        conv = sum(jnp.einsum("ble,ec->blc", xpad[:, t:t + l_out, :], w[t])
                   for t in range(k)) + b
        m = MAXPOOL_KERNEL_SIZE
        P = l_out // m
        pooled = conv[:, :P * m, :].reshape(conv.shape[0], P, m, -1).max(axis=2)
        outs.append(jnp.transpose(pooled, (0, 2, 1)).reshape(conv.shape[0], -1))
    x = jnp.concatenate(outs, axis=1)
    for i, (w, b) in enumerate(zip(params["lin_w"], params["lin_b"])):
        x = x @ w + b
        if i < len(params["lin_w"]) - 1:
            x = jnp.maximum(x, 0.0)
    return jax.nn.log_softmax(x, axis=1)


if __name__ == "__main__":
    key = jax.random.PRNGKey(0)
    k_tok, k_par = jax.random.split(key)
    tokens = jax.random.randint(k_tok, (BATCH, SEQ_LEN), 0, VOCAB_SIZE, dtype=jnp.int32)
    params = init_params(k_par)

    out = jax.jit(cnn_classifier_forward)(tokens, params)
    out = jax.block_until_ready(out)

    ref = reference_forward(tokens, params)
    assert out.shape == (BATCH, LABEL_SIZE), out.shape
    assert jnp.allclose(out, ref, atol=1e-4, rtol=1e-4), (out, ref)
    print("KERNEL_OK")
</pallas_src>

<mosaic_0001>
module attributes {stable_mosaic.version = 11 : i64} {
  func.func @_fused_kernel(%arg0: i32, %arg1: memref<32x1xi32, #tpu.memory_space<vmem>>, %arg2: memref<50x32xf32, #tpu.memory_space<vmem>>, %arg3: memref<128x16xf32, #tpu.memory_space<vmem>>, %arg4: memref<1x16xf32, #tpu.memory_space<vmem>>, %arg5: memref<128x32xf32, #tpu.memory_space<vmem>>, %arg6: memref<1x32xf32, #tpu.memory_space<vmem>>, %arg7: memref<32x4xf32, #tpu.memory_space<vmem>>, %arg8: memref<1x4xf32, #tpu.memory_space<vmem>>, %arg9: memref<2x4xf32, #tpu.memory_space<vmem>>, %arg10: memref<32x128xf32, #tpu.memory_space<vmem>>, %arg11: memref<2x128xf32, #tpu.memory_space<vmem>>) attributes {dimension_semantics = [#tpu.dimension_semantics<arbitrary>], iteration_bounds = array<i64: 1>, scalar_prefetch = 0 : i64, scratch_operands = 2 : i64, tpu.core_type = #tpu.core_type<tc>, window_params = [{pipeline_mode = #tpu.pipeline_mode<synchronous>, transform_indices = @transform_0, window_bounds = array<i64: 32, 1>}, {pipeline_mode = #tpu.pipeline_mode<synchronous>, transform_indices = @transform_1, window_bounds = array<i64: 50, 32>}, {pipeline_mode = #tpu.pipeline_mode<synchronous>, transform_indices = @transform_2, window_bounds = array<i64: 128, 16>}, {pipeline_mode = #tpu.pipeline_mode<synchronous>, transform_indices = @transform_3, window_bounds = array<i64: 1, 16>}, {pipeline_mode = #tpu.pipeline_mode<synchronous>, transform_indices = @transform_4, window_bounds = array<i64: 128, 32>}, {pipeline_mode = #tpu.pipeline_mode<synchronous>, transform_indices = @transform_5, window_bounds = array<i64: 1, 32>}, {pipeline_mode = #tpu.pipeline_mode<synchronous>, transform_indices = @transform_6, window_bounds = array<i64: 32, 4>}, {pipeline_mode = #tpu.pipeline_mode<synchronous>, transform_indices = @transform_7, window_bounds = array<i64: 1, 4>}, {pipeline_mode = #tpu.pipeline_mode<synchronous>, transform_indices = @transform_8, window_bounds = array<i64: 2, 4>}]} {
    %c0 = arith.constant 0 : index
    %c0_0 = arith.constant 0 : index
    %0 = vector.load %arg1[%c0, %c0_0] : memref<32x1xi32, #tpu.memory_space<vmem>>, vector<32x1xi32>
    %1 = tpu.iota {dimensions = array<i32: 1>} : vector<32x50xi32>
    %2 = vector.broadcast %0 : vector<32x1xi32> to vector<32x50xi32>
    %3 = arith.cmpi eq, %1, %2 : vector<32x50xi32>
    %cst = arith.constant 1.000000e+00 : f32
    %cst_1 = arith.constant 0.000000e+00 : f32
    %4 = vector.broadcast %cst : f32 to vector<32x50xf32>
    %5 = vector.broadcast %cst_1 : f32 to vector<32x50xf32>
    %6 = arith.select %3, %4, %5 : vector<32x50xi1>, vector<32x50xf32>
    %c0_2 = arith.constant 0 : index
    %c0_3 = arith.constant 0 : index
    %7 = vector.load %arg2[%c0_2, %c0_3] : memref<50x32xf32, #tpu.memory_space<vmem>>, vector<50x32xf32>
    %cst_4 = arith.constant dense<0.000000e+00> : vector<32x32xf32>
    %8 = tpu.matmul %6, %7, %cst_4 {dimension_numbers = #tpu.dot_dimension_numbers<[1], [0], [0], [1], [0, 0, 1, 1], [], []>} : vector<32x50xf32>, vector<50x32xf32>, vector<32x32xf32> -> vector<32x32xf32>
    %cst_5 = arith.constant 0.000000e+00 : f32
    %9 = vector.broadcast %cst_5 : f32 to vector<32x32xf32>
    %10 = arith.maximumf %8, %9 : vector<32x32xf32>
    %cst_6 = arith.constant 0.000000e+00 : f32
    %11 = vector.broadcast %cst_6 : f32 to vector<32x128xf32>
    %c0_7 = arith.constant 0 : index
    %c0_8 = arith.constant 0 : index
    %12 = vector.load %arg10[%c0_7, %c0_8] : memref<32x128xf32, #tpu.memory_space<vmem>>, vector<32x128xf32>
    tpu.vector_store %arg10[%c0_7, %c0_8], %11 {strides = array<i32>} : memref<32x128xf32, #tpu.memory_space<vmem>>, vector<32x128xf32>,
    %13 = vector.extract_strided_slice %10 {offsets = [0, 0], sizes = [15, 32], strides = [1, 1]} : vector<32x32xf32> to vector<15x32xf32>
    %c1 = arith.constant 1 : index
    %c0_9 = arith.constant 0 : index
    %14 = vector.load %arg10[%c1, %c0_9] : memref<32x128xf32, #tpu.memory_space<vmem>>, vector<15x32xf32>
    tpu.vector_store %arg10[%c1, %c0_9], %13 {strides = array<i32>} : memref<32x128xf32, #tpu.memory_space<vmem>>, vector<15x32xf32>,
    %15 = vector.extract_strided_slice %10 {offsets = [0, 0], sizes = [16, 32], strides = [1, 1]} : vector<32x32xf32> to vector<16x32xf32>
    %c0_10 = arith.constant 0 : index
    %c32 = arith.constant 32 : index
    %16 = vector.load %arg10[%c0_10, %c32] : memref<32x128xf32, #tpu.memory_space<vmem>>, vector<16x32xf32>
    tpu.vector_store %arg10[%c0_10, %c32], %15 {strides = array<i32>} : memref<32x128xf32, #tpu.memory_space<vmem>>, vector<16x32xf32>,
    %17 = vector.extract_strided_slice %10 {offsets = [1, 0], sizes = [15, 32], strides = [1, 1]} : vector<32x32xf32> to vector<15x32xf32>
    %c0_11 = arith.constant 0 : index
    %c64 = arith.constant 64 : index
    %18 = vector.load %arg10[%c0_11, %c64] : memref<32x128xf32, #tpu.memory_space<vmem>>, vector<15x32xf32>
    tpu.vector_store %arg10[%c0_11, %c64], %17 {strides = array<i32>} : memref<32x128xf32, #tpu.memory_space<vmem>>, vector<15x32xf32>,
    %19 = vector.extract_strided_slice %10 {offsets = [2, 0], sizes = [14, 32], strides = [1, 1]} : vector<32x32xf32> to vector<14x32xf32>
    %c0_12 = arith.constant 0 : index
    %c96 = arith.constant 96 : index
    %20 = vector.load %arg10[%c0_12, %c96] : memref<32x128xf32, #tpu.memory_space<vmem>>, vector<14x32xf32>
    tpu.vector_store %arg10[%c0_12, %c96], %19 {strides = array<i32>} : memref<32x128xf32, #tpu.memory_space<vmem>>, vector<14x32xf32>,
    %21 = vector.extract_strided_slice %10 {offsets = [16, 0], sizes = [15, 32], strides = [1, 1]} : vector<32x32xf32> to vector<15x32xf32>
    %c17 = arith.constant 17 : index
    %c0_13 = arith.constant 0 : index
    %22 = vector.load %arg10[%c17, %c0_13] : memref<32x128xf32, #tpu.memory_space<vmem>>, vector<15x32xf32>
    tpu.vector_store %arg10[%c17, %c0_13], %21 {strides = array<i32>} : memref<32x128xf32, #tpu.memory_space<vmem>>, vector<15x32xf32>,
    %23 = vector.extract_strided_slice %10 {offsets = [16, 0], sizes = [16, 32], strides = [1, 1]} : vector<32x32xf32> to vector<16x32xf32>
    %c16 = arith.constant 16 : index
    %c32_14 = arith.constant 32 : index
    %24 = vector.load %arg10[%c16, %c32_14] : memref<32x128xf32, #tpu.memory_space<vmem>>, vector<16x32xf32>
    tpu.vector_store %arg10[%c16, %c32_14], %23 {strides = array<i32>} : memref<32x128xf32, #tpu.memory_space<vmem>>, vector<16x32xf32>,
    %25 = vector.extract_strided_slice %10 {offsets = [17, 0], sizes = [15, 32], strides = [1, 1]} : vector<32x32xf32> to vector<15x32xf32>
    %c16_15 = arith.constant 16 : index
    %c64_16 = arith.constant 64 : index
    %26 = vector.load %arg10[%c16_15, %c64_16] : memref<32x128xf32, #tpu.memory_space<vmem>>, vector<15x32xf32>
    tpu.vector_store %arg10[%c16_15, %c64_16], %25 {strides = array<i32>} : memref<32x128xf32, #tpu.memory_space<vmem>>, vector<15x32xf32>,
    %27 = vector.extract_strided_slice %10 {offsets = [18, 0], sizes = [14, 32], strides = [1, 1]} : vector<32x32xf32> to vector<14x32xf32>
    %c16_17 = arith.constant 16 : index
    %c96_18 = arith.constant 96 : index
    %28 = vector.load %arg10[%c16_17, %c96_18] : memref<32x128xf32, #tpu.memory_space<vmem>>, vector<14x32xf32>
    tpu.vector_store %arg10[%c16_17, %c96_18], %27 {strides = array<i32>} : memref<32x128xf32, #tpu.memory_space<vmem>>, vector<14x32xf32>,
    %c0_19 = arith.constant 0 : index
    %c0_20 = arith.constant 0 : index
    %29 = vector.load %arg10[%c0_19, %c0_20] : memref<32x128xf32, #tpu.memory_space<vmem>>, vector<32x128xf32>
    %c0_21 = arith.constant 0 : index
    %c0_22 = arith.constant 0 : index
    %30 = vector.load %arg3[%c0_21, %c0_22] : memref<128x16xf32, #tpu.memory_space<vmem>>, vector<128x16xf32>
    %cst_23 = arith.constant dense<0.000000e+00> : vector<32x16xf32>
    %31 = tpu.matmul %29, %30, %cst_23 {dimension_numbers = #tpu.dot_dimension_numbers<[1], [0], [0], [1], [0, 0, 1, 1], [], []>} : vector<32x128xf32>, vector<128x16xf32>, vector<32x16xf32> -> vector<32x16xf32>
    %c0_24 = arith.constant 0 : index
    %c0_25 = arith.constant 0 : index
    %32 = vector.load %arg4[%c0_24, %c0_25] : memref<1x16xf32, #tpu.memory_space<vmem>>, vector<1x16xf32>
    %33 = vector.broadcast %32 : vector<1x16xf32> to vector<32x16xf32>
    %34 = arith.addf %31, %33 : vector<32x16xf32>
    %35 = vector.shape_cast %34 : vector<32x16xf32> to vector<16x2x16xf32>
    %cst_26 = arith.constant dense<0xFF800000> : vector<16x16xf32>
    %36 = vector.multi_reduction <maximumf>, %35, %cst_26 [1] : vector<16x2x16xf32> to vector<16x16xf32>
    %37 = vector.extract_strided_slice %36 {offsets = [0, 0], sizes = [1, 16], strides = [1, 1]} : vector<16x16xf32> to vector<1x16xf32>
    %c0_27 = arith.constant 0 : index
    %c0_28 = arith.constant 0 : index
    %38 = vector.load %arg11[%c0_27, %c0_28] : memref<2x128xf32, #tpu.memory_space<vmem>>, vector<1x16xf32>
    tpu.vector_store %arg11[%c0_27, %c0_28], %37 {strides = array<i32>} : memref<2x128xf32, #tpu.memory_space<vmem>>, vector<1x16xf32>,
    %39 = vector.extract_strided_slice %36 {offsets = [1, 0], sizes = [1, 16], strides = [1, 1]} : vector<16x16xf32> to vector<1x16xf32>
    %c0_29 = arith.constant 0 : index
    %c16_30 = arith.constant 16 : index
    %40 = vector.load %arg11[%c0_29, %c16_30] : memref<2x128xf32, #tpu.memory_space<vmem>>, vector<1x16xf32>
    tpu.vector_store %arg11[%c0_29, %c16_30], %39 {strides = array<i32>} : memref<2x128xf32, #tpu.memory_space<vmem>>, vector<1x16xf32>,
    %41 = vector.extract_strided_slice %36 {offsets = [2, 0], sizes = [1, 16], strides = [1, 1]} : vector<16x16xf32> to vector<1x16xf32>
    %c0_31 = arith.constant 0 : index
    %c32_32 = arith.constant 32 : index
    %42 = vector.load %arg11[%c0_31, %c32_32] : memref<2x128xf32, #tpu.memory_space<vmem>>, vector<1x16xf32>
    tpu.vector_store %arg11[%c0_31, %c32_32], %41 {strides = array<i32>} : memref<2x128xf32, #tpu.memory_space<vmem>>, vector<1x16xf32>,
    %43 = vector.extract_strided_slice %36 {offsets = [3, 0], sizes = [1, 16], strides = [1, 1]} : vector<16x16xf32> to vector<1x16xf32>
    %c0_33 = arith.constant 0 : index
    %c48 = arith.constant 48 : index
    %44 = vector.load %arg11[%c0_33, %c48] : memref<2x128xf32, #tpu.memory_space<vmem>>, vector<1x16xf32>
    tpu.vector_store %arg11[%c0_33, %c48], %43 {strides = array<i32>} : memref<2x128xf32, #tpu.memory_space<vmem>>, vector<1x16xf32>,
    %45 = vector.extract_strided_slice %36 {offsets = [4, 0], sizes = [1, 16], strides = [1, 1]} : vector<16x16xf32> to vector<1x16xf32>
    %c0_34 = arith.constant 0 : index
    %c64_35 = arith.constant 64 : index
    %46 = vector.load %arg11[%c0_34, %c64_35] : memref<2x128xf32, #tpu.memory_space<vmem>>, vector<1x16xf32>
    tpu.vector_store %arg11[%c0_34, %c64_35], %45 {strides = array<i32>} : memref<2x128xf32, #tpu.memory_space<vmem>>, vector<1x16xf32>,
    %47 = vector.extract_strided_slice %36 {offsets = [5, 0], sizes = [1, 16], strides = [1, 1]} : vector<16x16xf32> to vector<1x16xf32>
    %c0_36 = arith.constant 0 : index
    %c80 = arith.constant 80 : index
    %48 = vector.load %arg11[%c0_36, %c80] : memref<2x128xf32, #tpu.memory_space<vmem>>, vector<1x16xf32>
    tpu.vector_store %arg11[%c0_36, %c80], %47 {strides = array<i32>} : memref<2x128xf32, #tpu.memory_space<vmem>>, vector<1x16xf32>,
    %49 = vector.extract_strided_slice %36 {offsets = [6, 0], sizes = [1, 16], strides = [1, 1]} : vector<16x16xf32> to vector<1x16xf32>
    %c0_37 = arith.constant 0 : index
    %c96_38 = arith.constant 96 : index
    %50 = vector.load %arg11[%c0_37, %c96_38] : memref<2x128xf32, #tpu.memory_space<vmem>>, vector<1x16xf32>
    tpu.vector_store %arg11[%c0_37, %c96_38], %49 {strides = array<i32>} : memref<2x128xf32, #tpu.memory_space<vmem>>, vector<1x16xf32>,
    %51 = vector.extract_strided_slice %36 {offsets = [7, 0], sizes = [1, 16], strides = [1, 1]} : vector<16x16xf32> to vector<1x16xf32>
    %c0_39 = arith.constant 0 : index
    %c112 = arith.constant 112 : index
    %52 = vector.load %arg11[%c0_39, %c112] : memref<2x128xf32, #tpu.memory_space<vmem>>, vector<1x16xf32>
    tpu.vector_store %arg11[%c0_39, %c112], %51 {strides = array<i32>} : memref<2x128xf32, #tpu.memory_space<vmem>>, vector<1x16xf32>,
    %53 = vector.extract_strided_slice %36 {offsets = [8, 0], sizes = [1, 16], strides = [1, 1]} : vector<16x16xf32> to vector<1x16xf32>
    %c1_40 = arith.constant 1 : index
    %c0_41 = arith.constant 0 : index
    %54 = vector.load %arg11[%c1_40, %c0_41] : memref<2x128xf32, #tpu.memory_space<vmem>>, vector<1x16xf32>
    tpu.vector_store %arg11[%c1_40, %c0_41], %53 {strides = array<i32>} : memref<2x128xf32, #tpu.memory_space<vmem>>, vector<1x16xf32>,
    %55 = vector.extract_strided_slice %36 {offsets = [9, 0], sizes = [1, 16], strides = [1, 1]} : vector<16x16xf32> to vector<1x16xf32>
    %c1_42 = arith.constant 1 : index
    %c16_43 = arith.constant 16 : index
    %56 = vector.load %arg11[%c1_42, %c16_43] : memref<2x128xf32, #tpu.memory_space<vmem>>, vector<1x16xf32>
    tpu.vector_store %arg11[%c1_42, %c16_43], %55 {strides = array<i32>} : memref<2x128xf32, #tpu.memory_space<vmem>>, vector<1x16xf32>,
    %57 = vector.extract_strided_slice %36 {offsets = [10, 0], sizes = [1, 16], strides = [1, 1]} : vector<16x16xf32> to vector<1x16xf32>
    %c1_44 = arith.constant 1 : index
    %c32_45 = arith.constant 32 : index
    %58 = vector.load %arg11[%c1_44, %c32_45] : memref<2x128xf32, #tpu.memory_space<vmem>>, vector<1x16xf32>
    tpu.vector_store %arg11[%c1_44, %c32_45], %57 {strides = array<i32>} : memref<2x128xf32, #tpu.memory_space<vmem>>, vector<1x16xf32>,
    %59 = vector.extract_strided_slice %36 {offsets = [11, 0], sizes = [1, 16], strides = [1, 1]} : vector<16x16xf32> to vector<1x16xf32>
    %c1_46 = arith.constant 1 : index
    %c48_47 = arith.constant 48 : index
    %60 = vector.load %arg11[%c1_46, %c48_47] : memref<2x128xf32, #tpu.memory_space<vmem>>, vector<1x16xf32>
    tpu.vector_store %arg11[%c1_46, %c48_47], %59 {strides = array<i32>} : memref<2x128xf32, #tpu.memory_space<vmem>>, vector<1x16xf32>,
    %61 = vector.extract_strided_slice %36 {offsets = [12, 0], sizes = [1, 16], strides = [1, 1]} : vector<16x16xf32> to vector<1x16xf32>
    %c1_48 = arith.constant 1 : index
    %c64_49 = arith.constant 64 : index
    %62 = vector.load %arg11[%c1_48, %c64_49] : memref<2x128xf32, #tpu.memory_space<vmem>>, vector<1x16xf32>
    tpu.vector_store %arg11[%c1_48, %c64_49], %61 {strides = array<i32>} : memref<2x128xf32, #tpu.memory_space<vmem>>, vector<1x16xf32>,
    %63 = vector.extract_strided_slice %36 {offsets = [13, 0], sizes = [1, 16], strides = [1, 1]} : vector<16x16xf32> to vector<1x16xf32>
    %c1_50 = arith.constant 1 : index
    %c80_51 = arith.constant 80 : index
    %64 = vector.load %arg11[%c1_50, %c80_51] : memref<2x128xf32, #tpu.memory_space<vmem>>, vector<1x16xf32>
    tpu.vector_store %arg11[%c1_50, %c80_51], %63 {strides = array<i32>} : memref<2x128xf32, #tpu.memory_space<vmem>>, vector<1x16xf32>,
    %65 = vector.extract_strided_slice %36 {offsets = [14, 0], sizes = [1, 16], strides = [1, 1]} : vector<16x16xf32> to vector<1x16xf32>
    %c1_52 = arith.constant 1 : index
    %c96_53 = arith.constant 96 : index
    %66 = vector.load %arg11[%c1_52, %c96_53] : memref<2x128xf32, #tpu.memory_space<vmem>>, vector<1x16xf32>
    tpu.vector_store %arg11[%c1_52, %c96_53], %65 {strides = array<i32>} : memref<2x128xf32, #tpu.memory_space<vmem>>, vector<1x16xf32>,
    %67 = vector.extract_strided_slice %36 {offsets = [15, 0], sizes = [1, 16], strides = [1, 1]} : vector<16x16xf32> to vector<1x16xf32>
    %c1_54 = arith.constant 1 : index
    %c112_55 = arith.constant 112 : index
    %68 = vector.load %arg11[%c1_54, %c112_55] : memref<2x128xf32, #tpu.memory_space<vmem>>, vector<1x16xf32>
    tpu.vector_store %arg11[%c1_54, %c112_55], %67 {strides = array<i32>} : memref<2x128xf32, #tpu.memory_space<vmem>>, vector<1x16xf32>,
    %c0_56 = arith.constant 0 : index
    %c0_57 = arith.constant 0 : index
    %69 = vector.load %arg11[%c0_56, %c0_57] : memref<2x128xf32, #tpu.memory_space<vmem>>, vector<2x128xf32>
    %c0_58 = arith.constant 0 : index
    %c0_59 = arith.constant 0 : index
    %70 = vector.load %arg5[%c0_58, %c0_59] : memref<128x32xf32, #tpu.memory_space<vmem>>, vector<128x32xf32>
    %c0_60 = arith.constant 0 : index
    %c0_61 = arith.constant 0 : index
    %71 = vector.load %arg6[%c0_60, %c0_61] : memref<1x32xf32, #tpu.memory_space<vmem>>, vector<1x32xf32>
    %cst_62 = arith.constant dense<0.000000e+00> : vector<2x32xf32>
    %72 = tpu.matmul %69, %70, %cst_62 {dimension_numbers = #tpu.dot_dimension_numbers<[1], [0], [0], [1], [0, 0, 1, 1], [], []>} : vector<2x128xf32>, vector<128x32xf32>, vector<2x32xf32> -> vector<2x32xf32>
    %73 = vector.broadcast %71 : vector<1x32xf32> to vector<2x32xf32>
    %74 = arith.addf %72, %73 : vector<2x32xf32>
    %cst_63 = arith.constant 0.000000e+00 : f32
    %75 = vector.broadcast %cst_63 : f32 to vector<2x32xf32>
    %76 = arith.maximumf %74, %75 : vector<2x32xf32>
    %c0_64 = arith.constant 0 : index
    %c0_65 = arith.constant 0 : index
    %77 = vector.load %arg7[%c0_64, %c0_65] : memref<32x4xf32, #tpu.memory_space<vmem>>, vector<32x4xf32>
    %c0_66 = arith.constant 0 : index
    %c0_67 = arith.constant 0 : index
    %78 = vector.load %arg8[%c0_66, %c0_67] : memref<1x4xf32, #tpu.memory_space<vmem>>, vector<1x4xf32>
    %cst_68 = arith.constant dense<0.000000e+00> : vector<2x4xf32>
    %79 = tpu.matmul %76, %77, %cst_68 {dimension_numbers = #tpu.dot_dimension_numbers<[1], [0], [0], [1], [0, 0, 1, 1], [], []>} : vector<2x32xf32>, vector<32x4xf32>, vector<2x4xf32> -> vector<2x4xf32>
    %80 = vector.broadcast %78 : vector<1x4xf32> to vector<2x4xf32>
    %81 = arith.addf %79, %80 : vector<2x4xf32>
    %cst_69 = arith.constant dense<0xFF800000> : vector<2xf32>
    %82 = vector.multi_reduction <maximumf>, %81, %cst_69 [1] : vector<2x4xf32> to vector<2xf32>
    %83 = vector.shape_cast %82 : vector<2xf32> to vector<2x1xf32>
    %84 = vector.broadcast %83 : vector<2x1xf32> to vector<2x4xf32>
    %85 = arith.subf %81, %84 : vector<2x4xf32>
    %86 = math.exp %85 : vector<2x4xf32>
    %cst_70 = arith.constant dense<0.000000e+00> : vector<2xf32>
    %87 = vector.multi_reduction <add>, %86, %cst_70 [1] : vector<2x4xf32> to vector<2xf32>
    %88 = vector.shape_cast %87 : vector<2xf32> to vector<2x1xf32>
    %89 = math.log %88 : vector<2x1xf32>
    %90 = vector.broadcast %89 : vector<2x1xf32> to vector<2x4xf32>
    %91 = arith.subf %85, %90 : vector<2x4xf32>
    %c0_71 = arith.constant 0 : index
    %c0_72 = arith.constant 0 : index
    %92 = vector.load %arg9[%c0_71, %c0_72] : memref<2x4xf32, #tpu.memory_space<vmem>>, vector<2x4xf32>
    tpu.vector_store %arg9[%c0_71, %c0_72], %91 {strides = array<i32>} : memref<2x4xf32, #tpu.memory_space<vmem>>, vector<2x4xf32>,
    return
  }
  func.func @transform_0(%arg0: i32) -> (i32, i32) {
    %c0_i32 = arith.constant 0 : i32
    %c0_i32_0 = arith.constant 0 : i32
    %c0_i32_1 = arith.constant 0 : i32
    return %c0_i32, %c0_i32_0 : i32, i32
  }
  func.func @transform_1(%arg0: i32) -> (i32, i32) {
    %c0_i32 = arith.constant 0 : i32
    %c0_i32_0 = arith.constant 0 : i32
    %c0_i32_1 = arith.constant 0 : i32
    return %c0_i32, %c0_i32_0 : i32, i32
  }
  func.func @transform_2(%arg0: i32) -> (i32, i32) {
    %c0_i32 = arith.constant 0 : i32
    %c0_i32_0 = arith.constant 0 : i32
    %c0_i32_1 = arith.constant 0 : i32
    return %c0_i32, %c0_i32_0 : i32, i32
  }
  func.func @transform_3(%arg0: i32) -> (i32, i32) {
    %c0_i32 = arith.constant 0 : i32
    %c0_i32_0 = arith.constant 0 : i32
    %c0_i32_1 = arith.constant 0 : i32
    return %c0_i32, %c0_i32_0 : i32, i32
  }
  func.func @transform_4(%arg0: i32) -> (i32, i32) {
    %c0_i32 = arith.constant 0 : i32
    %c0_i32_0 = arith.constant 0 : i32
    %c0_i32_1 = arith.constant 0 : i32
    return %c0_i32, %c0_i32_0 : i32, i32
  }
  func.func @transform_5(%arg0: i32) -> (i32, i32) {
    %c0_i32 = arith.constant 0 : i32
    %c0_i32_0 = arith.constant 0 : i32
    %c0_i32_1 = arith.constant 0 : i32
    return %c0_i32, %c0_i32_0 : i32, i32
  }
  func.func @transform_6(%arg0: i32) -> (i32, i32) {
    %c0_i32 = arith.constant 0 : i32
    %c0_i32_0 = arith.constant 0 : i32
    %c0_i32_1 = arith.constant 0 : i32
    return %c0_i32, %c0_i32_0 : i32, i32
  }
  func.func @transform_7(%arg0: i32) -> (i32, i32) {
    %c0_i32 = arith.constant 0 : i32
    %c0_i32_0 = arith.constant 0 : i32
    %c0_i32_1 = arith.constant 0 : i32
    return %c0_i32, %c0_i32_0 : i32, i32
  }
  func.func @transform_8(%arg0: i32) -> (i32, i32) {
    %c0_i32 = arith.constant 0 : i32
    %c0_i32_0 = arith.constant 0 : i32
    %c0_i32_1 = arith.constant 0 : i32
    return %c0_i32, %c0_i32_0 : i32, i32
  }
}

</mosaic_0001>

<llo_original>
// kernel: cnn_classifier_forward.1
$region0: #{cnn_classifier_forward.1}
  #allocation0 [shape = 'u32[]', space=smem, size = 0x4, offset = 0x4, fixed_abs, tag = 'smem constant byte address 0x4 - core index']
  #allocation1 [shape = 'u32[144,128]{1,0:T(1,128)}', space=vmem, size = 0x12000, scoped, tag = 'internal scratch']
  #allocation2 [shape = 'f32[32,128]{1,0:T(8,128)}', space=vmem, size = 0x4000, scoped, tag = 'scratch operand']
  #allocation3 [shape = 'f32[2,128]{1,0:T(2,128)}', space=vmem, size = 0x400, scoped, tag = 'scratch operand']
  %s0 = inlined_call_operand.vmem [shape: s32[32,1], index: 0, kind: input, shape index: {}]
  %s1 = inlined_call_operand.vmem [shape: f32[50,32], index: 1, kind: input, shape index: {}]
  %s2 = inlined_call_operand.vmem [shape: f32[128,16], index: 2, kind: input, shape index: {}]
  %s3 = inlined_call_operand.vmem [shape: f32[1,16], index: 3, kind: input, shape index: {}]
  %s4 = inlined_call_operand.vmem [shape: f32[128,32], index: 4, kind: input, shape index: {}]
  %s5 = inlined_call_operand.vmem [shape: f32[1,32], index: 5, kind: input, shape index: {}]
  %s6 = inlined_call_operand.vmem [shape: f32[32,4], index: 6, kind: input, shape index: {}]
  %s7 = inlined_call_operand.vmem [shape: f32[1,4], index: 7, kind: input, shape index: {}]
  %s8 = inlined_call_operand.hbm [shape: f32[2,4], index: 8, kind: output, shape index: {}]
  %s9 = sld [smem:[#allocation0]]
  $region42: #{cnn_classifier_forward.1} parent=0
    _
  %s11 = ssub.s32 1, %s9
  %s12 = scalar_select 0, %s11, %s9
  $region1: #{cnn_classifier_forward.1} parent=0
    #allocation4 [shape = 'u8[1024]{0}', space=vmem, size = 0x400, scoped, tag = 'output window, operand 0, single buffered']
    #allocation5 [shape = 's32[1]{0}', space=sflag, size = 0x4, scoped, tag = 'scoped memory for cnn_classifier_forward.1']
    %13 = vsyncpa [#allocation5], 0
    // Predicated region
    $region2: #{cnn_classifier_forward.1} parent=1 // pred_check
      _
    $region3: #{cnn_classifier_forward.1} parent=1 // pred_check_branch
      %15 = sbr.rel (0) target = $region5
    $region4: #{cnn_classifier_forward.1} parent=1 // pred_region
      _
    $region5: #{cnn_classifier_forward.1} parent=1 // pred_fallthru
      _
    // Predicated region
    $region6: #{cnn_classifier_forward.1} parent=1 // pred_check
      _
    $region7: #{cnn_classifier_forward.1} parent=1 // pred_check_branch
      %17 = sbr.rel (0) target = $region9
    $region8: #{cnn_classifier_forward.1} parent=1 // pred_region
      _
    $region9: #{cnn_classifier_forward.1} parent=1 // pred_fallthru
      _
    // Predicated region
    $region10: #{cnn_classifier_forward.1} parent=1 // pred_check
      _
    $region11: #{cnn_classifier_forward.1} parent=1 // pred_check_branch
      %19 = sbr.rel (0) target = $region13
    $region12: #{cnn_classifier_forward.1} parent=1 // pred_region
      _
    $region13: #{cnn_classifier_forward.1} parent=1 // pred_fallthru
      _
    // Predicated region
    $region14: #{cnn_classifier_forward.1} parent=1 // pred_check
      _
    $region15: #{cnn_classifier_forward.1} parent=1 // pred_check_branch
      %21 = sbr.rel (0) target = $region17
    $region16: #{cnn_classifier_forward.1} parent=1 // pred_region
      _
    $region17: #{cnn_classifier_forward.1} parent=1 // pred_fallthru
      _
    // Predicated region
    $region18: #{cnn_classifier_forward.1} parent=1 // pred_check
      _
    $region19: #{cnn_classifier_forward.1} parent=1 // pred_check_branch
      %23 = sbr.rel (0) target = $region21
    $region20: #{cnn_classifier_forward.1} parent=1 // pred_region
      _
    $region21: #{cnn_classifier_forward.1} parent=1 // pred_fallthru
      _
    // Predicated region
    $region22: #{cnn_classifier_forward.1} parent=1 // pred_check
      _
    $region23: #{cnn_classifier_forward.1} parent=1 // pred_check_branch
      %25 = sbr.rel (0) target = $region25
    $region24: #{cnn_classifier_forward.1} parent=1 // pred_region
      _
    $region25: #{cnn_classifier_forward.1} parent=1 // pred_fallthru
      _
    // Predicated region
    $region26: #{cnn_classifier_forward.1} parent=1 // pred_check
      _
    $region27: #{cnn_classifier_forward.1} parent=1 // pred_check_branch
      %27 = sbr.rel (0) target = $region29
    $region28: #{cnn_classifier_forward.1} parent=1 // pred_region
      _
    $region29: #{cnn_classifier_forward.1} parent=1 // pred_fallthru
      _
    // Predicated region
    $region30: #{cnn_classifier_forward.1} parent=1 // pred_check
      _
    $region31: #{cnn_classifier_forward.1} parent=1 // pred_check_branch
      %29 = sbr.rel (0) target = $region33
    $region32: #{cnn_classifier_forward.1} parent=1 // pred_region
      _
    $region33: #{cnn_classifier_forward.1} parent=1 // pred_fallthru
      _
    %v30 = vld [vmem:[%s0] sm:$0xff]
    %v31 = vld [vmem:[%s0 + $0x8] sm:$0xff]
    %v32 = vld [vmem:[%s0 + $0x10] sm:$0xff]
    %v33 = vld [vmem:[%s0 + $0x18] sm:$0xff]
    %v34 = vlaneseq
    %v35 = vand.u32 %v34, 127
    %36 = vset.pattern.permute.xlu0 0
    %37 = vperm.xlu0 %36, %v30
    %v38 = vpop.permute.xlu0 %37
    %39 = vset.pattern.permute.xlu0 0
    %40 = vperm.xlu0 %39, %v31
    %v41 = vpop.permute.xlu0 %40
    %42 = vset.pattern.permute.xlu0 0
    %43 = vperm.xlu0 %42, %v32
    %v44 = vpop.permute.xlu0 %43
    %45 = vset.pattern.permute.xlu0 0
    %46 = vperm.xlu0 %45, %v33
    %v47 = vpop.permute.xlu0 %46
    %vm48 = vcmp.eq.s32.totalorder %v35, %v38
    %vm49 = vcmp.eq.s32.totalorder %v35, %v41
    %vm50 = vcmp.eq.s32.totalorder %v35, %v44
    %vm51 = vcmp.eq.s32.totalorder %v35, %v47
    %v52 = vsel %vm48, 1.0, 0.0
    %v53 = vsel %vm49, 1.0, 0.0
    %v54 = vsel %vm50, 1.0, 0.0
    %v55 = vsel %vm51, 1.0, 0.0
    %v56 = vld [vmem:[%s1] sm:$0xff]
    %v57 = vld [vmem:[%s1 + $0x8] sm:$0xff]
    %v58 = vld [vmem:[%s1 + $0x10] sm:$0xff]
    %v59 = vld [vmem:[%s1 + $0x18] sm:$0xff]
    %v60 = vld [vmem:[%s1 + $0x20] sm:$0xff]
    %v61 = vld [vmem:[%s1 + $0x28] sm:$0xff]
    %v62 = vld [vmem:[%s1 + $0x30] sm:$0x3]
    %vm63 = vcmask 408576
    %v65 = vsel %vm63, %v52, 0
    %v68 = vsel %vm63, %v53, 0
    %v71 = vsel %vm63, %v54, 0
    %v74 = vsel %vm63, %v55, 0
    %vm76 = vcmask 1041408
    %v78 = vsel %vm76, %v62, 0
    %80 = vmatprep.subr.mxu0 0.0
    %81 = vmatpush1.msra.mxu0 0.0
    %82 = vmatprep.subr.mxu0 0.0
    %83 = vmatpush1.msra.mxu0 0.0
    %84 = vmatprep.subr.mxu0 0.0
    %85 = vmatpush1.msra.mxu0 0.0
    %86 = vmatprep.subr.mxu0 0.0
    %87 = vmatpush1.msra.mxu0 0.0
    %88 = vmatprep.subr.mxu0 0.0
    %89 = vmatpush1.msra.mxu0 0.0
    %90 = vmatprep.subr.mxu0 0.0
    %91 = vmatpush1.msra.mxu0 0.0
    %92 = vmatprep.subr.mxu0 0.0
    %93 = vmatpush1.msra.mxu0 0.0
    %94 = vmatprep.subr.mxu0 0.0
    %95 = vmatpush1.msra.mxu0 0.0
    %96 = vmatprep.subr.mxu0 0.0
    %97 = vmatpush1.msra.mxu0 0.0
    %98 = vmatprep.subr.mxu0 0.0
    %99 = vmatpush1.msra.mxu0 %v78
    %100 = vmatprep.subr.mxu0 0.0
    %101 = vmatpush1.msra.mxu0 %v61
    %102 = vmatprep.subr.mxu0 0.0
    %103 = vmatpush1.msra.mxu0 %v60
    %104 = vmatprep.subr.mxu0 0.0
    %105 = vmatpush1.msra.mxu0 %v59
    %106 = vmatprep.subr.mxu0 0.0
    %107 = vmatpush1.msra.mxu0 %v58
    %108 = vmatprep.subr.mxu0 0.0
    %109 = vmatpush1.msra.mxu0 %v57
    %110 = vmatprep.subr.mxu0 0.0
    %111 = vmatpush1.msra.mxu0 %v56
    %112 = vmatprep.subr.mxu0 0.0
    %113 = vmatpush2.msra.mxu0 0.0
    %114 = vmatprep.subr.mxu0 0.0
    %115 = vmatpush2.msra.mxu0 0.0
    %116 = vmatprep.subr.mxu0 0.0
    %117 = vmatpush2.msra.mxu0 0.0
    %118 = vmatprep.subr.mxu0 0.0
    %119 = vmatpush2.msra.mxu0 0.0
    %120 = vmatprep.subr.mxu0 0.0
    %121 = vmatpush2.msra.mxu0 0.0
    %122 = vmatprep.subr.mxu0 0.0
    %123 = vmatpush2.msra.mxu0 0.0
    %124 = vmatprep.subr.mxu0 0.0
    %125 = vmatpush2.msra.mxu0 0.0
    %126 = vmatprep.subr.mxu0 0.0
    %127 = vmatpush2.msra.mxu0 0.0
    %128 = vmatprep.subr.mxu0 0.0
    %129 = vmatpush2.msra.mxu0 0.0
    %130 = vmatprep.subr.mxu0 0.0
    %131 = vmatpush2.msra.mxu0 0.0
    %132 = vmatprep.subr.mxu0 0.0
    %133 = vmatpush2.msra.mxu0 0.0
    %134 = vmatprep.subr.mxu0 0.0
    %135 = vmatpush2.msra.mxu0 0.0
    %136 = vmatprep.subr.mxu0 0.0
    %137 = vmatpush2.msra.mxu0 0.0
    %138 = vmatprep.subr.mxu0 0.0
    %139 = vmatpush2.msra.mxu0 0.0
    %140 = vmatprep.subr.mxu0 0.0
    %141 = vmatpush2.msra.mxu0 0.0
    %142 = vmatprep.subr.mxu0 0.0
    %143 = vmatpush2.msra.mxu0 0.0
    %144 = vmatprep.mubr.f32.mxu0 0.0
    %145 = vmatmul.mubr.f32.gmra.mxu0 %v65
    %v146 = vpop.f32.mrf.mxu0
    %v147 = vadd.f32 0.0, %v146
    %v148 = vpop.f32.mrf.mxu0
    %149 = vmatprep.mubr.f32.mxu0 0.0
    %150 = vmatmul.mubr.f32.gmra.mxu0 %v68
    %v151 = vpop.f32.mrf.mxu0
    %v152 = vadd.f32 0.0, %v151
    %v153 = vpop.f32.mrf.mxu0
    %154 = vmatprep.mubr.f32.mxu0 0.0
    %155 = vmatmul.mubr.f32.gmra.mxu0 %v71
    %v156 = vpop.f32.mrf.mxu0
    %v157 = vadd.f32 0.0, %v156
    %v158 = vpop.f32.mrf.mxu0
    %159 = vmatprep.mubr.f32.mxu0 0.0
    %160 = vmatmul.mubr.f32.gmra.mxu0 %v74
    %v161 = vpop.f32.mrf.mxu0
    %v162 = vadd.f32 0.0, %v161
    %v163 = vpop.f32.mrf.mxu0
    %164 = vdwg.mxu0
    %v165 = vmax.f32 %v147, 0.0
    %v166 = vmax.f32 %v152, 0.0
    %v167 = vmax.f32 %v157, 0.0
    %v168 = vmax.f32 %v162, 0.0
    %169 = vst [vmem:[#allocation2] sm:$0xff] 0.0
    %170 = vst [vmem:[#allocation2 + $0x8] sm:$0xff] 0.0
    %171 = vst [vmem:[#allocation2 + $0x10] sm:$0xff] 0.0
    %172 = vst [vmem:[#allocation2 + $0x18] sm:$0xff] 0.0
    %vm173 = vcmask 261120
    %174 = vst.msk [vmem:[#allocation2 + $0x1] sm:$0xff] %vm173, %v165
    %vm175 = vcmask 260096
    %176 = vst.msk [vmem:[#allocation2 + $0x9] sm:$0x7f] %vm175, %v166
    %179 = vrot.lane.b32.xlu0 %v165, 32
    %v180 = vpop.permute.xlu0 %179
    %181 = vrot.lane.b32.xlu0 %v166, 32
    %v182 = vpop.permute.xlu0 %181
    %vm185 = vcmask 523520
    %186 = vst.msk [vmem:[#allocation2] sm:$0xff] %vm185, %v180
    %187 = vst.msk [vmem:[#allocation2 + $0x8] sm:$0xff] %vm185, %v182
    %188 = vrot.lane.b32.xlu0 %v165, 64
    %v189 = vpop.permute.xlu0 %188
    %190 = vrot.lane.b32.xlu0 %v166, 64
    %v191 = vpop.permute.xlu0 %190
    %vm194 = vcmask 785921
    %195 = vst.msk [vmem:[#allocation2 - $0x1] sm:$0xfe] %vm194, %v189
    %vm196 = vcmask 785920
    %197 = vst.msk [vmem:[#allocation2 + $0x7] sm:$0xff] %vm196, %v191
    %198 = vrot.lane.b32.xlu0 %v165, 96
    %v199 = vpop.permute.xlu0 %198
    %200 = vrot.lane.b32.xlu0 %v166, 96
    %v201 = vpop.permute.xlu0 %200
    %vm204 = vcmask 1048322
    %205 = vst.msk [vmem:[#allocation2 - $0x2] sm:$0xfc] %vm204, %v199
    %vm206 = vcmask 1048320
    %207 = vst.msk [vmem:[#allocation2 + $0x6] sm:$0xff] %vm206, %v201
    %208 = vst.msk [vmem:[#allocation2 + $0x11] sm:$0xff] %vm173, %v167
    %209 = vst.msk [vmem:[#allocation2 + $0x19] sm:$0x7f] %vm175, %v168
    %212 = vrot.lane.b32.xlu0 %v167, 32
    %v213 = vpop.permute.xlu0 %212
    %214 = vrot.lane.b32.xlu0 %v168, 32
    %v215 = vpop.permute.xlu0 %214
    %218 = vst.msk [vmem:[#allocation2 + $0x10] sm:$0xff] %vm185, %v213
    %219 = vst.msk [vmem:[#allocation2 + $0x18] sm:$0xff] %vm185, %v215
    %220 = vrot.lane.b32.xlu0 %v167, 64
    %v221 = vpop.permute.xlu0 %220
    %222 = vrot.lane.b32.xlu0 %v168, 64
    %v223 = vpop.permute.xlu0 %222
    %226 = vst.msk [vmem:[#allocation2 + $0xf] sm:$0xfe] %vm194, %v221
    %227 = vst.msk [vmem:[#allocation2 + $0x17] sm:$0xff] %vm196, %v223
    %228 = vrot.lane.b32.xlu0 %v167, 96
    %v229 = vpop.permute.xlu0 %228
    %230 = vrot.lane.b32.xlu0 %v168, 96
    %v231 = vpop.permute.xlu0 %230
    %234 = vst.msk [vmem:[#allocation2 + $0xe] sm:$0xfc] %vm204, %v229
    %235 = vst.msk [vmem:[#allocation2 + $0x16] sm:$0xff] %vm206, %v231
    %v236 = vld [vmem:[#allocation2] sm:$0xff]
    %v237 = vld [vmem:[#allocation2 + $0x8] sm:$0xff]
    %v238 = vld [vmem:[#allocation2 + $0x10] sm:$0xff]
    %v239 = vld [vmem:[#allocation2 + $0x18] sm:$0xff]
    %v240 = vld [vmem:[%s2] sm:$0xff]
    %v241 = vld [vmem:[%s2 + $0x8] sm:$0xff]
    %v242 = vld [vmem:[%s2 + $0x10] sm:$0xff]
    %v243 = vld [vmem:[%s2 + $0x18] sm:$0xff]
    %v244 = vld [vmem:[%s2 + $0x20] sm:$0xff]
    %v245 = vld [vmem:[%s2 + $0x28] sm:$0xff]
    %v246 = vld [vmem:[%s2 + $0x30] sm:$0xff]
    %v247 = vld [vmem:[%s2 + $0x38] sm:$0xff]
    %v248 = vld [vmem:[%s2 + $0x40] sm:$0xff]
    %v249 = vld [vmem:[%s2 + $0x48] sm:$0xff]
    %v250 = vld [vmem:[%s2 + $0x50] sm:$0xff]
    %v251 = vld [vmem:[%s2 + $0x58] sm:$0xff]
    %v252 = vld [vmem:[%s2 + $0x60] sm:$0xff]
    %v253 = vld [vmem:[%s2 + $0x68] sm:$0xff]
    %v254 = vld [vmem:[%s2 + $0x70] sm:$0xff]
    %v255 = vld [vmem:[%s2 + $0x78] sm:$0xff]
    %v256 = vld [vmem:[%s3] sm:$0x1]
    %v258 = vlaneseq
    %v259 = vshrl.u32 %v258, 7
    %v260 = vsub.s32 0, %v259
    %v261 = vrot.slane %v256, %v260
    %263 = vmatprep.subr.mxu0 0.0
    %264 = vmatpush1.msra.mxu0 %v255
    %265 = vmatprep.subr.mxu0 0.0
    %266 = vmatpush1.msra.mxu0 %v254
    %267 = vmatprep.subr.mxu0 0.0
    %268 = vmatpush1.msra.mxu0 %v253
    %269 = vmatprep.subr.mxu0 0.0
    %270 = vmatpush1.msra.mxu0 %v252
    %271 = vmatprep.subr.mxu0 0.0
    %272 = vmatpush1.msra.mxu0 %v251
    %273 = vmatprep.subr.mxu0 0.0
    %274 = vmatpush1.msra.mxu0 %v250
    %275 = vmatprep.subr.mxu0 0.0
    %276 = vmatpush1.msra.mxu0 %v249
    %277 = vmatprep.subr.mxu0 0.0
    %278 = vmatpush1.msra.mxu0 %v248
    %279 = vmatprep.subr.mxu0 0.0
    %280 = vmatpush1.msra.mxu0 %v247
    %281 = vmatprep.subr.mxu0 0.0
    %282 = vmatpush1.msra.mxu0 %v246
    %283 = vmatprep.subr.mxu0 0.0
    %284 = vmatpush1.msra.mxu0 %v245
    %285 = vmatprep.subr.mxu0 0.0
    %286 = vmatpush1.msra.mxu0 %v244
    %287 = vmatprep.subr.mxu0 0.0
    %288 = vmatpush1.msra.mxu0 %v243
    %289 = vmatprep.subr.mxu0 0.0
    %290 = vmatpush1.msra.mxu0 %v242
    %291 = vmatprep.subr.mxu0 0.0
    %292 = vmatpush1.msra.mxu0 %v241
    %293 = vmatprep.subr.mxu0 0.0
    %294 = vmatpush1.msra.mxu0 %v240
    %295 = vmatprep.subr.mxu0 0.0
    %296 = vmatpush2.msra.mxu0 0.0
    %297 = vmatprep.subr.mxu0 0.0
    %298 = vmatpush2.msra.mxu0 0.0
    %299 = vmatprep.subr.mxu0 0.0
    %300 = vmatpush2.msra.mxu0 0.0
    %301 = vmatprep.subr.mxu0 0.0
    %302 = vmatpush2.msra.mxu0 0.0
    %303 = vmatprep.subr.mxu0 0.0
    %304 = vmatpush2.msra.mxu0 0.0
    %305 = vmatprep.subr.mxu0 0.0
    %306 = vmatpush2.msra.mxu0 0.0
    %307 = vmatprep.subr.mxu0 0.0
    %308 = vmatpush2.msra.mxu0 0.0
    %309 = vmatprep.subr.mxu0 0.0
    %310 = vmatpush2.msra.mxu0 0.0
    %311 = vmatprep.subr.mxu0 0.0
    %312 = vmatpush2.msra.mxu0 0.0
    %313 = vmatprep.subr.mxu0 0.0
    %314 = vmatpush2.msra.mxu0 0.0
    %315 = vmatprep.subr.mxu0 0.0
    %316 = vmatpush2.msra.mxu0 0.0
    %317 = vmatprep.subr.mxu0 0.0
    %318 = vmatpush2.msra.mxu0 0.0
    %319 = vmatprep.subr.mxu0 0.0
    %320 = vmatpush2.msra.mxu0 0.0
    %321 = vmatprep.subr.mxu0 0.0
    %322 = vmatpush2.msra.mxu0 0.0
    %323 = vmatprep.subr.mxu0 0.0
    %324 = vmatpush2.msra.mxu0 0.0
    %325 = vmatprep.subr.mxu0 0.0
    %326 = vmatpush2.msra.mxu0 0.0
    %327 = vmatprep.mubr.f32.mxu0 0.0
    %328 = vmatmul.mubr.f32.gmra.mxu0 %v236
    %v329 = vpop.f32.mrf.mxu0
    %v330 = vadd.f32 %v261, %v329
    %v331 = vpop.f32.mrf.mxu0
    %332 = vmatprep.mubr.f32.mxu0 0.0
    %333 = vmatmul.mubr.f32.gmra.mxu0 %v237
    %v334 = vpop.f32.mrf.mxu0
    %v335 = vadd.f32 %v261, %v334
    %v336 = vpop.f32.mrf.mxu0
    %337 = vmatprep.mubr.f32.mxu0 0.0
    %338 = vmatmul.mubr.f32.gmra.mxu0 %v238
    %v339 = vpop.f32.mrf.mxu0
    %v340 = vadd.f32 %v261, %v339
    %v341 = vpop.f32.mrf.mxu0
    %342 = vmatprep.mubr.f32.mxu0 0.0
    %343 = vmatmul.mubr.f32.gmra.mxu0 %v239
    %v344 = vpop.f32.mrf.mxu0
    %v345 = vadd.f32 %v261, %v344
    %v346 = vpop.f32.mrf.mxu0
    %347 = vdwg.mxu0
    %v352 = vcombine.high %v330, %v330
    %v354 = vunpack.c.l.s4 1983009808
    %v355 = vunpack.c.0.s8 %v354
    %v356 = vlaneseq
    %v357 = vshrl.u32 %v356, 7
    %v358 = vsub.s32 %v355, %v357
    %v359 = vrot.slane %v330, %v358
    %v361 = vunpack.c.l.s4 1983009808
    %v362 = vunpack.c.0.s8 %v361
    %v363 = vlaneseq
    %v364 = vshrl.u32 %v363, 7
    %v365 = vsub.s32 %v362, %v364
    %v366 = vrot.slane %v352, %v365
    %v367 = vcombine.high %v359, %v359
    %v368 = vcombine.high %v366, %v366
    %v369 = vcombine.high %v335, %v335
    %v371 = vunpack.c.l.s4 1983009808
    %v372 = vunpack.c.0.s8 %v371
    %v373 = vlaneseq
    %v374 = vshrl.u32 %v373, 7
    %v375 = vsub.s32 %v372, %v374
    %v376 = vrot.slane %v335, %v375
    %v378 = vunpack.c.l.s4 1983009808
    %v379 = vunpack.c.0.s8 %v378
    %v380 = vlaneseq
    %v381 = vshrl.u32 %v380, 7
    %v382 = vsub.s32 %v379, %v381
    %v383 = vrot.slane %v369, %v382
    %v384 = vcombine.high %v376, %v376
    %v385 = vcombine.high %v383, %v383
    %v386 = vcombine.high %v340, %v340
    %v388 = vunpack.c.l.s4 1983009808
    %v389 = vunpack.c.0.s8 %v388
    %v390 = vlaneseq
    %v391 = vshrl.u32 %v390, 7
    %v392 = vsub.s32 %v389, %v391
    %v393 = vrot.slane %v340, %v392
    %v395 = vunpack.c.l.s4 1983009808
    %v396 = vunpack.c.0.s8 %v395
    %v397 = vlaneseq
    %v398 = vshrl.u32 %v397, 7
    %v399 = vsub.s32 %v396, %v398
    %v400 = vrot.slane %v386, %v399
    %v401 = vcombine.high %v393, %v393
    %v402 = vcombine.high %v400, %v400
    %v403 = vcombine.high %v345, %v345
    %v405 = vunpack.c.l.s4 1983009808
    %v406 = vunpack.c.0.s8 %v405
    %v407 = vlaneseq
    %v408 = vshrl.u32 %v407, 7
    %v409 = vsub.s32 %v406, %v408
    %v410 = vrot.slane %v345, %v409
    %v412 = vunpack.c.l.s4 1983009808
    %v413 = vunpack.c.0.s8 %v412
    %v414 = vlaneseq
    %v415 = vshrl.u32 %v414, 7
    %v416 = vsub.s32 %v413, %v415
    %v417 = vrot.slane %v403, %v416
    %v418 = vcombine.high %v410, %v410
    %v419 = vcombine.high %v417, %v417
    %vm436 = vcmask 123904
    %v437 = vsel %vm436, %v359, -inf
    %v438 = vrot.slane %v437, 4
    %v439 = vmax.f32 %v437, %v438
    %v440 = vrot.slane %v439, 2
    %v441 = vmax.f32 %v439, %v440
    %v442 = vrot.slane %v441, 1
    %v443 = vmax.f32 %v441, %v442
    %v444 = vsel %vm436, %v367, -inf
    %v445 = vrot.slane %v444, 4
    %v446 = vmax.f32 %v444, %v445
    %v447 = vrot.slane %v446, 2
    %v448 = vmax.f32 %v446, %v447
    %v449 = vrot.slane %v448, 1
    %v450 = vmax.f32 %v448, %v449
    %v451 = vsel %vm436, %v366, -inf
    %v452 = vrot.slane %v451, 4
    %v453 = vmax.f32 %v451, %v452
    %v454 = vrot.slane %v453, 2
    %v455 = vmax.f32 %v453, %v454
    %v456 = vrot.slane %v455, 1
    %v457 = vmax.f32 %v455, %v456
    %v458 = vsel %vm436, %v368, -inf
    %v459 = vrot.slane %v458, 4
    %v460 = vmax.f32 %v458, %v459
    %v461 = vrot.slane %v460, 2
    %v462 = vmax.f32 %v460, %v461
    %v463 = vrot.slane %v462, 1
    %v464 = vmax.f32 %v462, %v463
    %v465 = vsel %vm436, %v376, -inf
    %v466 = vrot.slane %v465, 4
    %v467 = vmax.f32 %v465, %v466
    %v468 = vrot.slane %v467, 2
    %v469 = vmax.f32 %v467, %v468
    %v470 = vrot.slane %v469, 1
    %v471 = vmax.f32 %v469, %v470
    %v472 = vsel %vm436, %v384, -inf
    %v473 = vrot.slane %v472, 4
    %v474 = vmax.f32 %v472, %v473
    %v475 = vrot.slane %v474, 2
    %v476 = vmax.f32 %v474, %v475
    %v477 = vrot.slane %v476, 1
    %v478 = vmax.f32 %v476, %v477
    %v479 = vsel %vm436, %v383, -inf
    %v480 = vrot.slane %v479, 4
    %v481 = vmax.f32 %v479, %v480
    %v482 = vrot.slane %v481, 2
    %v483 = vmax.f32 %v481, %v482
    %v484 = vrot.slane %v483, 1
    %v485 = vmax.f32 %v483, %v484
    %v486 = vsel %vm436, %v385, -inf
    %v487 = vrot.slane %v486, 4
    %v488 = vmax.f32 %v486, %v487
    %v489 = vrot.slane %v488, 2
    %v490 = vmax.f32 %v488, %v489
    %v491 = vrot.slane %v490, 1
    %v492 = vmax.f32 %v490, %v491
    %v493 = vsel %vm436, %v393, -inf
    %v494 = vrot.slane %v493, 4
    %v495 = vmax.f32 %v493, %v494
    %v496 = vrot.slane %v495, 2
    %v497 = vmax.f32 %v495, %v496
    %v498 = vrot.slane %v497, 1
    %v499 = vmax.f32 %v497, %v498
    %v500 = vsel %vm436, %v401, -inf
    %v501 = vrot.slane %v500, 4
    %v502 = vmax.f32 %v500, %v501
    %v503 = vrot.slane %v502, 2
    %v504 = vmax.f32 %v502, %v503
    %v505 = vrot.slane %v504, 1
    %v506 = vmax.f32 %v504, %v505
    %v507 = vsel %vm436, %v400, -inf
    %v508 = vrot.slane %v507, 4
    %v509 = vmax.f32 %v507, %v508
    %v510 = vrot.slane %v509, 2
    %v511 = vmax.f32 %v509, %v510
    %v512 = vrot.slane %v511, 1
    %v513 = vmax.f32 %v511, %v512
    %v514 = vsel %vm436, %v402, -inf
    %v515 = vrot.slane %v514, 4
    %v516 = vmax.f32 %v514, %v515
    %v517 = vrot.slane %v516, 2
    %v518 = vmax.f32 %v516, %v517
    %v519 = vrot.slane %v518, 1
    %v520 = vmax.f32 %v518, %v519
    %v521 = vsel %vm436, %v410, -inf
    %v522 = vrot.slane %v521, 4
    %v523 = vmax.f32 %v521, %v522
    %v524 = vrot.slane %v523, 2
    %v525 = vmax.f32 %v523, %v524
    %v526 = vrot.slane %v525, 1
    %v527 = vmax.f32 %v525, %v526
    %v528 = vsel %vm436, %v418, -inf
    %v529 = vrot.slane %v528, 4
    %v530 = vmax.f32 %v528, %v529
    %v531 = vrot.slane %v530, 2
    %v532 = vmax.f32 %v530, %v531
    %v533 = vrot.slane %v532, 1
    %v534 = vmax.f32 %v532, %v533
    %v535 = vsel %vm436, %v417, -inf
    %v536 = vrot.slane %v535, 4
    %v537 = vmax.f32 %v535, %v536
    %v538 = vrot.slane %v537, 2
    %v539 = vmax.f32 %v537, %v538
    %v540 = vrot.slane %v539, 1
    %v541 = vmax.f32 %v539, %v540
    %v542 = vsel %vm436, %v419, -inf
    %v543 = vrot.slane %v542, 4
    %v544 = vmax.f32 %v542, %v543
    %v545 = vrot.slane %v544, 2
    %v546 = vmax.f32 %v544, %v545
    %v547 = vrot.slane %v546, 1
    %v548 = vmax.f32 %v546, %v547
    %vm549 = vcmask 122880
    %550 = vst.msk [vmem:[#allocation3] sm:$0x1] %vm549, %v443
    %552 = vrot.lane.b32.xlu0 %v450, 16
    %v553 = vpop.permute.xlu0 %552
    %vm555 = vcmask 254080
    %556 = vst.msk [vmem:[#allocation3] sm:$0x1] %vm555, %v553
    %558 = vrot.lane.b32.xlu0 %v457, 32
    %v559 = vpop.permute.xlu0 %558
    %vm561 = vcmask 385280
    %562 = vst.msk [vmem:[#allocation3] sm:$0x1] %vm561, %v559
    %564 = vrot.lane.b32.xlu0 %v464, 48
    %v565 = vpop.permute.xlu0 %564
    %vm567 = vcmask 516480
    %568 = vst.msk [vmem:[#allocation3] sm:$0x1] %vm567, %v565
    %570 = vrot.lane.b32.xlu0 %v471, 64
    %v571 = vpop.permute.xlu0 %570
    %vm573 = vcmask 647680
    %574 = vst.msk [vmem:[#allocation3] sm:$0x1] %vm573, %v571
    %576 = vrot.lane.b32.xlu0 %v478, 80
    %v577 = vpop.permute.xlu0 %576
    %vm579 = vcmask 778880
    %580 = vst.msk [vmem:[#allocation3] sm:$0x1] %vm579, %v577
    %582 = vrot.lane.b32.xlu0 %v485, 96
    %v583 = vpop.permute.xlu0 %582
    %vm585 = vcmask 910080
    %586 = vst.msk [vmem:[#allocation3] sm:$0x1] %vm585, %v583
    %588 = vrot.lane.b32.xlu0 %v492, 112
    %v589 = vpop.permute.xlu0 %588
    %vm591 = vcmask 1041280
    %592 = vst.msk [vmem:[#allocation3] sm:$0x1] %vm591, %v589
    %593 = vst.msk [vmem:[#allocation3 + $0x1] sm:$0x1] %vm549, %v499
    %595 = vrot.lane.b32.xlu0 %v506, 16
    %v596 = vpop.permute.xlu0 %595
    %598 = vst.msk [vmem:[#allocation3 + $0x1] sm:$0x1] %vm555, %v596
    %600 = vrot.lane.b32.xlu0 %v513, 32
    %v601 = vpop.permute.xlu0 %600
    %603 = vst.msk [vmem:[#allocation3 + $0x1] sm:$0x1] %vm561, %v601
    %605 = vrot.lane.b32.xlu0 %v520, 48
    %v606 = vpop.permute.xlu0 %605
    %608 = vst.msk [vmem:[#allocation3 + $0x1] sm:$0x1] %vm567, %v606
    %610 = vrot.lane.b32.xlu0 %v527, 64
    %v611 = vpop.permute.xlu0 %610
    %613 = vst.msk [vmem:[#allocation3 + $0x1] sm:$0x1] %vm573, %v611
    %615 = vrot.lane.b32.xlu0 %v534, 80
    %v616 = vpop.permute.xlu0 %615
    %618 = vst.msk [vmem:[#allocation3 + $0x1] sm:$0x1] %vm579, %v616
    %620 = vrot.lane.b32.xlu0 %v541, 96
    %v621 = vpop.permute.xlu0 %620
    %623 = vst.msk [vmem:[#allocation3 + $0x1] sm:$0x1] %vm585, %v621
    %625 = vrot.lane.b32.xlu0 %v548, 112
    %v626 = vpop.permute.xlu0 %625
    %628 = vst.msk [vmem:[#allocation3 + $0x1] sm:$0x1] %vm591, %v626
    %v629 = vld [vmem:[#allocation3] sm:$0x3]
    %v630 = vld [vmem:[%s4] sm:$0xff]
    %v631 = vld [vmem:[%s4 + $0x8] sm:$0xff]
    %v632 = vld [vmem:[%s4 + $0x10] sm:$0xff]
    %v633 = vld [vmem:[%s4 + $0x18] sm:$0xff]
    %v634 = vld [vmem:[%s4 + $0x20] sm:$0xff]
    %v635 = vld [vmem:[%s4 + $0x28] sm:$0xff]
    %v636 = vld [vmem:[%s4 + $0x30] sm:$0xff]
    %v637 = vld [vmem:[%s4 + $0x38] sm:$0xff]
    %v638 = vld [vmem:[%s4 + $0x40] sm:$0xff]
    %v639 = vld [vmem:[%s4 + $0x48] sm:$0xff]
    %v640 = vld [vmem:[%s4 + $0x50] sm:$0xff]
    %v641 = vld [vmem:[%s4 + $0x58] sm:$0xff]
    %v642 = vld [vmem:[%s4 + $0x60] sm:$0xff]
    %v643 = vld [vmem:[%s4 + $0x68] sm:$0xff]
    %v644 = vld [vmem:[%s4 + $0x70] sm:$0xff]
    %v645 = vld [vmem:[%s4 + $0x78] sm:$0xff]
    %v646 = vld [vmem:[%s5] sm:$0x1]
    %v648 = vlaneseq
    %v649 = vshrl.u32 %v648, 7
    %v650 = vsub.s32 0, %v649
    %v651 = vrot.slane %v646, %v650
    %653 = vmatprep.subr.mxu0 0.0
    %654 = vmatpush1.msra.mxu0 %v645
    %655 = vmatprep.subr.mxu0 0.0
    %656 = vmatpush1.msra.mxu0 %v644
    %657 = vmatprep.subr.mxu0 0.0
    %658 = vmatpush1.msra.mxu0 %v643
    %659 = vmatprep.subr.mxu0 0.0
    %660 = vmatpush1.msra.mxu0 %v642
    %661 = vmatprep.subr.mxu0 0.0
    %662 = vmatpush1.msra.mxu0 %v641
    %663 = vmatprep.subr.mxu0 0.0
    %664 = vmatpush1.msra.mxu0 %v640
    %665 = vmatprep.subr.mxu0 0.0
    %666 = vmatpush1.msra.mxu0 %v639
    %667 = vmatprep.subr.mxu0 0.0
    %668 = vmatpush1.msra.mxu0 %v638
    %669 = vmatprep.subr.mxu0 0.0
    %670 = vmatpush1.msra.mxu0 %v637
    %671 = vmatprep.subr.mxu0 0.0
    %672 = vmatpush1.msra.mxu0 %v636
    %673 = vmatprep.subr.mxu0 0.0
    %674 = vmatpush1.msra.mxu0 %v635
    %675 = vmatprep.subr.mxu0 0.0
    %676 = vmatpush1.msra.mxu0 %v634
    %677 = vmatprep.subr.mxu0 0.0
    %678 = vmatpush1.msra.mxu0 %v633
    %679 = vmatprep.subr.mxu0 0.0
    %680 = vmatpush1.msra.mxu0 %v632
    %681 = vmatprep.subr.mxu0 0.0
    %682 = vmatpush1.msra.mxu0 %v631
    %683 = vmatprep.subr.mxu0 0.0
    %684 = vmatpush1.msra.mxu0 %v630
    %685 = vmatprep.subr.mxu0 0.0
    %686 = vmatpush2.msra.mxu0 0.0
    %687 = vmatprep.subr.mxu0 0.0
    %688 = vmatpush2.msra.mxu0 0.0
    %689 = vmatprep.subr.mxu0 0.0
    %690 = vmatpush2.msra.mxu0 0.0
    %691 = vmatprep.subr.mxu0 0.0
    %692 = vmatpush2.msra.mxu0 0.0
    %693 = vmatprep.subr.mxu0 0.0
    %694 = vmatpush2.msra.mxu0 0.0
    %695 = vmatprep.subr.mxu0 0.0
    %696 = vmatpush2.msra.mxu0 0.0
    %697 = vmatprep.subr.mxu0 0.0
    %698 = vmatpush2.msra.mxu0 0.0
    %699 = vmatprep.subr.mxu0 0.0
    %700 = vmatpush2.msra.mxu0 0.0
    %701 = vmatprep.subr.mxu0 0.0
    %702 = vmatpush2.msra.mxu0 0.0
    %703 = vmatprep.subr.mxu0 0.0
    %704 = vmatpush2.msra.mxu0 0.0
    %705 = vmatprep.subr.mxu0 0.0
    %706 = vmatpush2.msra.mxu0 0.0
    %707 = vmatprep.subr.mxu0 0.0
    %708 = vmatpush2.msra.mxu0 0.0
    %709 = vmatprep.subr.mxu0 0.0
    %710 = vmatpush2.msra.mxu0 0.0
    %711 = vmatprep.subr.mxu0 0.0
    %712 = vmatpush2.msra.mxu0 0.0
    %713 = vmatprep.subr.mxu0 0.0
    %714 = vmatpush2.msra.mxu0 0.0
    %715 = vmatprep.subr.mxu0 0.0
    %716 = vmatpush2.msra.mxu0 0.0
    %717 = vmatprep.mubr.f32.mxu0 0.0
    %718 = vmatmul.mubr.f32.gmra.mxu0 %v629
    %v719 = vpop.f32.mrf.mxu0
    %v720 = vadd.f32 %v651, %v719
    %v721 = vpop.f32.mrf.mxu0
    %722 = vdwg.mxu0
    %v723 = vmax.f32 %v720, 0.0
    %v724 = vld [vmem:[%s6] sm:$0xff]
    %v725 = vld [vmem:[%s6 + $0x8] sm:$0xff]
    %v726 = vld [vmem:[%s6 + $0x10] sm:$0xff]
    %v727 = vld [vmem:[%s6 + $0x18] sm:$0xff]
    %v728 = vld [vmem:[%s7] sm:$0x1]
    %v730 = vlaneseq
    %v731 = vshrl.u32 %v730, 7
    %v732 = vsub.s32 0, %v731
    %v733 = vrot.slane %v728, %v732
    %v736 = vsel %vm173, %v723, 0
    %738 = vmatprep.subr.mxu0 0.0
    %739 = vmatpush1.msra.mxu0 0.0
    %740 = vmatprep.subr.mxu0 0.0
    %741 = vmatpush1.msra.mxu0 0.0
    %742 = vmatprep.subr.mxu0 0.0
    %743 = vmatpush1.msra.mxu0 0.0
    %744 = vmatprep.subr.mxu0 0.0
    %745 = vmatpush1.msra.mxu0 0.0
    %746 = vmatprep.subr.mxu0 0.0
    %747 = vmatpush1.msra.mxu0 0.0
    %748 = vmatprep.subr.mxu0 0.0
    %749 = vmatpush1.msra.mxu0 0.0
    %750 = vmatprep.subr.mxu0 0.0
    %751 = vmatpush1.msra.mxu0 0.0
    %752 = vmatprep.subr.mxu0 0.0
    %753 = vmatpush1.msra.mxu0 0.0
    %754 = vmatprep.subr.mxu0 0.0
    %755 = vmatpush1.msra.mxu0 0.0
    %756 = vmatprep.subr.mxu0 0.0
    %757 = vmatpush1.msra.mxu0 0.0
    %758 = vmatprep.subr.mxu0 0.0
    %759 = vmatpush1.msra.mxu0 0.0
    %760 = vmatprep.subr.mxu0 0.0
    %761 = vmatpush1.msra.mxu0 0.0
    %762 = vmatprep.subr.mxu0 0.0
    %763 = vmatpush1.msra.mxu0 %v727
    %764 = vmatprep.subr.mxu0 0.0
    %765 = vmatpush1.msra.mxu0 %v726
    %766 = vmatprep.subr.mxu0 0.0
    %767 = vmatpush1.msra.mxu0 %v725
    %768 = vmatprep.subr.mxu0 0.0
    %769 = vmatpush1.msra.mxu0 %v724
    %770 = vmatprep.subr.mxu0 0.0
    %771 = vmatpush2.msra.mxu0 0.0
    %772 = vmatprep.subr.mxu0 0.0
    %773 = vmatpush2.msra.mxu0 0.0
    %774 = vmatprep.subr.mxu0 0.0
    %775 = vmatpush2.msra.mxu0 0.0
    %776 = vmatprep.subr.mxu0 0.0
    %777 = vmatpush2.msra.mxu0 0.0
    %778 = vmatprep.subr.mxu0 0.0
    %779 = vmatpush2.msra.mxu0 0.0
    %780 = vmatprep.subr.mxu0 0.0
    %781 = vmatpush2.msra.mxu0 0.0
    %782 = vmatprep.subr.mxu0 0.0
    %783 = vmatpush2.msra.mxu0 0.0
    %784 = vmatprep.subr.mxu0 0.0
    %785 = vmatpush2.msra.mxu0 0.0
    %786 = vmatprep.subr.mxu0 0.0
    %787 = vmatpush2.msra.mxu0 0.0
    %788 = vmatprep.subr.mxu0 0.0
    %789 = vmatpush2.msra.mxu0 0.0
    %790 = vmatprep.subr.mxu0 0.0
    %791 = vmatpush2.msra.mxu0 0.0
    %792 = vmatprep.subr.mxu0 0.0
    %793 = vmatpush2.msra.mxu0 0.0
    %794 = vmatprep.subr.mxu0 0.0
    %795 = vmatpush2.msra.mxu0 0.0
    %796 = vmatprep.subr.mxu0 0.0
    %797 = vmatpush2.msra.mxu0 0.0
    %798 = vmatprep.subr.mxu0 0.0
    %799 = vmatpush2.msra.mxu0 0.0
    %800 = vmatprep.subr.mxu0 0.0
    %801 = vmatpush2.msra.mxu0 0.0
    %802 = vmatprep.mubr.f32.mxu0 0.0
    %803 = vmatmul.mubr.f32.gmra.mxu0 %v736
    %v804 = vpop.f32.mrf.mxu0
    %v805 = vadd.f32 %v733, %v804
    %v806 = vpop.f32.mrf.mxu0
    %807 = vdwg.mxu0
    %vm808 = vcmask 25600
    %v809 = vsel %vm808, %v805, -inf
    %810 = vmax.xlane.f32.xlu0 %v809
    %v811 = vpop.xlane.xlu0 %810
    %v812 = vsub.f32 %v805, %v811
    %v813 = vmul.f32 %v812, 1.442695
    %v814 = vpow.pop %v813
    %v815 = vsel %vm808, %v814, 0.0
    %816 = vadd.xlane.f32.xlu0 %v815
    %v817 = vpop.xlane.xlu0 %816
    %v818 = vlog2.pop %v817
    %v819 = vmul.f32 %v818, 0.6931472
    %v820 = vsub.f32 %v812, %v819
    %821 = vst.msk [vmem:[#allocation4] sm:$0x3] %vm808, %v820
    // Predicated region
    $region34: #{cnn_classifier_forward.1} parent=1 // pred_check
      _
    $region35: #{cnn_classifier_forward.1} parent=1 // pred_check_branch
      %823 = sbr.rel (0) target = $region37
    $region36: #{cnn_classifier_forward.1} parent=1 // pred_region
      %s825 = ssub.s32 32, 32
      %826 = vsyncadd [#allocation5], %s825
      %s828 = sshll.u32 [#allocation4], 4
      %s829 = int_to_ptr.vmem [resolvable:$true] %s828
      %831 = dma.vmem_to_hbm [thread:$0]  %s829, 32, %s8, [#allocation5]
    $region37: #{cnn_classifier_forward.1} parent=1 // pred_fallthru
      _
    // Predicated region
    $region38: #{cnn_classifier_forward.1} parent=1 // pred_check
      _
    $region39: #{cnn_classifier_forward.1} parent=1 // pred_check_branch
      %833 = sbr.rel (0) target = $region41
    $region40: #{cnn_classifier_forward.1} parent=1 // pred_region
      %834 = dma.done [#allocation5], 32
    $region41: #{cnn_classifier_forward.1} parent=1 // pred_fallthru
      _
    %835 = vsyncpa [#allocation5], 1

</llo_original>
